<compile_context>
chip_gen: v7x
topology: tpu7x:2x2x1
jax: 0.10.0
libtpu: 0.0.40
codegen_flags: <defaults>
</compile_context>

<pallas_src>
import jax
import jax.numpy as jnp
from jax.experimental import pallas as pl
from jax.experimental.pallas import tpu as pltpu

HIDDEN = 20
LANES = 128


def mlp_kernel(w1_ref, b1_ref, w2_ref, b2_ref, x_ref, o_ref):
    # x_ref / o_ref: (TILE_R, 128) lane-dense tile of the flattened batch.
    # w1/b1/w2: (20,) f32 in SMEM, b2: (1,) f32 in SMEM.
    x = x_ref[...]
    acc = jnp.zeros_like(x) + b2_ref[0]
    for j in range(HIDDEN):                       # unrolled: 20-term FMA/relu chain (VPU only)
        h = jnp.maximum(x * w1_ref[j] + b1_ref[j], 0.0)
        acc = acc + h * w2_ref[j]
    o_ref[...] = acc.astype(o_ref.dtype)


def net_forward(x, w1, b1, w2, b2, *, max_tile_rows=1024):
    """y = relu(x @ W1 + b1) @ W2 + b2 for x of shape (N, 1)."""
    N = x.shape[0]
    w1f = jnp.reshape(w1, (HIDDEN,)).astype(jnp.float32)
    b1f = jnp.reshape(b1, (HIDDEN,)).astype(jnp.float32)
    w2f = jnp.reshape(w2, (HIDDEN,)).astype(jnp.float32)
    b2f = jnp.reshape(b2, (1,)).astype(jnp.float32)

    # Lane-dense layout: flatten (N, 1) -> (rows_padded, 128).
    max_tile_rows = max(8, (max_tile_rows // 8) * 8)          # keep sublane-aligned
    rows = pl.cdiv(N, LANES)
    tile_rows = min(max_tile_rows, ((rows + 7) // 8) * 8)     # multiple of 8
    rows_padded = pl.cdiv(rows, tile_rows) * tile_rows
    total = rows_padded * LANES

    xf = jnp.ravel(x).astype(jnp.float32)
    xf = jnp.pad(xf, (0, total - N))
    x2d = xf.reshape(rows_padded, LANES)

    y2d = pl.pallas_call(
        mlp_kernel,
        out_shape=jax.ShapeDtypeStruct((rows_padded, LANES), jnp.float32),
        grid=(rows_padded // tile_rows,),
        in_specs=[
            pl.BlockSpec(memory_space=pltpu.SMEM),                  # w1 (20,)
            pl.BlockSpec(memory_space=pltpu.SMEM),                  # b1 (20,)
            pl.BlockSpec(memory_space=pltpu.SMEM),                  # w2 (20,)
            pl.BlockSpec(memory_space=pltpu.SMEM),                  # b2 (1,)
            pl.BlockSpec((tile_rows, LANES), lambda i: (i, 0)),     # x tile
        ],
        out_specs=pl.BlockSpec((tile_rows, LANES), lambda i: (i, 0)),
        compiler_params=pltpu.CompilerParams(
            dimension_semantics=("parallel",),
        ),
    )(w1f, b1f, w2f, b2f, x2d)

    # Drop padding, restore (N, 1).
    return y2d.reshape(total)[:N].reshape(N, 1)


def init_params(key):
    # Deterministic init mirroring torch.nn.Linear default: U(-1/sqrt(fan_in), +1/sqrt(fan_in)).
    k1, k2, k3, k4 = jax.random.split(key, 4)
    bound1 = 1.0 / jnp.sqrt(1.0)    # hidden: in_features = 1
    bound2 = 1.0 / jnp.sqrt(20.0)   # predict: in_features = 20
    w1 = jax.random.uniform(k1, (1, HIDDEN), jnp.float32, -bound1, bound1)
    b1 = jax.random.uniform(k2, (HIDDEN,), jnp.float32, -bound1, bound1)
    w2 = jax.random.uniform(k3, (HIDDEN, 1), jnp.float32, -bound2, bound2)
    b2 = jax.random.uniform(k4, (1,), jnp.float32, -bound2, bound2)
    return w1, b1, w2, b2


if __name__ == "__main__":
    key = jax.random.PRNGKey(0)
    pkey, xkey1, xkey2 = jax.random.split(key, 3)
    w1, b1, w2, b2 = init_params(pkey)

    # Small shape consistent with the module (batch of scalar inputs).
    N_small = 8
    x_small = jax.random.normal(xkey1, (N_small, 1), jnp.float32)
    y_small = net_forward(x_small, w1, b1, w2, b2)
    jax.block_until_ready(y_small)
    ref_small = jnp.maximum(x_small @ w1 + b1, 0.0) @ w2 + b2
    assert y_small.shape == (N_small, 1)
    assert jnp.allclose(y_small, ref_small, atol=1e-5, rtol=1e-5)

    # Larger ragged batch to exercise the lane-dense tiling, padding and multi-step grid.
    N_big = 5000
    x_big = jax.random.normal(xkey2, (N_big, 1), jnp.float32)
    y_big = net_forward(x_big, w1, b1, w2, b2, max_tile_rows=8)
    jax.block_until_ready(y_big)
    ref_big = jnp.maximum(x_big @ w1 + b1, 0.0) @ w2 + b2
    assert y_big.shape == (N_big, 1)
    assert jnp.allclose(y_big, ref_big, atol=1e-5, rtol=1e-5)

    print("KERNEL_OK")
</pallas_src>

<mosaic_0001>
module attributes {stable_mosaic.version = 11 : i64} {
  func.func @mlp_kernel(%arg0: i32, %arg1: memref<20xf32, #tpu.memory_space<smem>>, %arg2: memref<20xf32, #tpu.memory_space<smem>>, %arg3: memref<20xf32, #tpu.memory_space<smem>>, %arg4: memref<1xf32, #tpu.memory_space<smem>>, %arg5: memref<8x128xf32, #tpu.memory_space<vmem>>, %arg6: memref<8x128xf32, #tpu.memory_space<vmem>>) attributes {dimension_semantics = [#tpu.dimension_semantics<parallel>], iteration_bounds = array<i64: 1>, scalar_prefetch = 0 : i64, scratch_operands = 0 : i64, tpu.core_type = #tpu.core_type<tc>, window_params = [{transform_indices = @transform_0, window_bounds = array<i64: 20>}, {transform_indices = @transform_1, window_bounds = array<i64: 20>}, {transform_indices = @transform_2, window_bounds = array<i64: 20>}, {transform_indices = @transform_3, window_bounds = array<i64: 1>}, {transform_indices = @transform_4, window_bounds = array<i64: 8, 128>}, {transform_indices = @transform_5, window_bounds = array<i64: 8, 128>}]} {
    %c0 = arith.constant 0 : index
    %c0_0 = arith.constant 0 : index
    %0 = vector.load %arg5[%c0, %c0_0] : memref<8x128xf32, #tpu.memory_space<vmem>>, vector<8x128xf32>
    %cst = arith.constant 0.000000e+00 : f32
    %1 = vector.broadcast %cst : f32 to vector<8x128xf32>
    %c0_1 = arith.constant 0 : index
    %2 = memref.load %arg4[%c0_1] : memref<1xf32, #tpu.memory_space<smem>>
    %3 = vector.broadcast %2 : f32 to vector<8x128xf32>
    %4 = arith.addf %1, %3 : vector<8x128xf32>
    %c0_2 = arith.constant 0 : index
    %5 = memref.load %arg1[%c0_2] : memref<20xf32, #tpu.memory_space<smem>>
    %6 = vector.broadcast %5 : f32 to vector<8x128xf32>
    %7 = arith.mulf %0, %6 : vector<8x128xf32>
    %c0_3 = arith.constant 0 : index
    %8 = memref.load %arg2[%c0_3] : memref<20xf32, #tpu.memory_space<smem>>
    %9 = vector.broadcast %8 : f32 to vector<8x128xf32>
    %10 = arith.addf %7, %9 : vector<8x128xf32>
    %cst_4 = arith.constant 0.000000e+00 : f32
    %11 = vector.broadcast %cst_4 : f32 to vector<8x128xf32>
    %12 = arith.maximumf %10, %11 : vector<8x128xf32>
    %c0_5 = arith.constant 0 : index
    %13 = memref.load %arg3[%c0_5] : memref<20xf32, #tpu.memory_space<smem>>
    %14 = vector.broadcast %13 : f32 to vector<8x128xf32>
    %15 = arith.mulf %12, %14 : vector<8x128xf32>
    %16 = arith.addf %4, %15 : vector<8x128xf32>
    %c1 = arith.constant 1 : index
    %17 = memref.load %arg1[%c1] : memref<20xf32, #tpu.memory_space<smem>>
    %18 = vector.broadcast %17 : f32 to vector<8x128xf32>
    %19 = arith.mulf %0, %18 : vector<8x128xf32>
    %c1_6 = arith.constant 1 : index
    %20 = memref.load %arg2[%c1_6] : memref<20xf32, #tpu.memory_space<smem>>
    %21 = vector.broadcast %20 : f32 to vector<8x128xf32>
    %22 = arith.addf %19, %21 : vector<8x128xf32>
    %cst_7 = arith.constant 0.000000e+00 : f32
    %23 = vector.broadcast %cst_7 : f32 to vector<8x128xf32>
    %24 = arith.maximumf %22, %23 : vector<8x128xf32>
    %c1_8 = arith.constant 1 : index
    %25 = memref.load %arg3[%c1_8] : memref<20xf32, #tpu.memory_space<smem>>
    %26 = vector.broadcast %25 : f32 to vector<8x128xf32>
    %27 = arith.mulf %24, %26 : vector<8x128xf32>
    %28 = arith.addf %16, %27 : vector<8x128xf32>
    %c2 = arith.constant 2 : index
    %29 = memref.load %arg1[%c2] : memref<20xf32, #tpu.memory_space<smem>>
    %30 = vector.broadcast %29 : f32 to vector<8x128xf32>
    %31 = arith.mulf %0, %30 : vector<8x128xf32>
    %c2_9 = arith.constant 2 : index
    %32 = memref.load %arg2[%c2_9] : memref<20xf32, #tpu.memory_space<smem>>
    %33 = vector.broadcast %32 : f32 to vector<8x128xf32>
    %34 = arith.addf %31, %33 : vector<8x128xf32>
    %cst_10 = arith.constant 0.000000e+00 : f32
    %35 = vector.broadcast %cst_10 : f32 to vector<8x128xf32>
    %36 = arith.maximumf %34, %35 : vector<8x128xf32>
    %c2_11 = arith.constant 2 : index
    %37 = memref.load %arg3[%c2_11] : memref<20xf32, #tpu.memory_space<smem>>
    %38 = vector.broadcast %37 : f32 to vector<8x128xf32>
    %39 = arith.mulf %36, %38 : vector<8x128xf32>
    %40 = arith.addf %28, %39 : vector<8x128xf32>
    %c3 = arith.constant 3 : index
    %41 = memref.load %arg1[%c3] : memref<20xf32, #tpu.memory_space<smem>>
    %42 = vector.broadcast %41 : f32 to vector<8x128xf32>
    %43 = arith.mulf %0, %42 : vector<8x128xf32>
    %c3_12 = arith.constant 3 : index
    %44 = memref.load %arg2[%c3_12] : memref<20xf32, #tpu.memory_space<smem>>
    %45 = vector.broadcast %44 : f32 to vector<8x128xf32>
    %46 = arith.addf %43, %45 : vector<8x128xf32>
    %cst_13 = arith.constant 0.000000e+00 : f32
    %47 = vector.broadcast %cst_13 : f32 to vector<8x128xf32>
    %48 = arith.maximumf %46, %47 : vector<8x128xf32>
    %c3_14 = arith.constant 3 : index
    %49 = memref.load %arg3[%c3_14] : memref<20xf32, #tpu.memory_space<smem>>
    %50 = vector.broadcast %49 : f32 to vector<8x128xf32>
    %51 = arith.mulf %48, %50 : vector<8x128xf32>
    %52 = arith.addf %40, %51 : vector<8x128xf32>
    %c4 = arith.constant 4 : index
    %53 = memref.load %arg1[%c4] : memref<20xf32, #tpu.memory_space<smem>>
    %54 = vector.broadcast %53 : f32 to vector<8x128xf32>
    %55 = arith.mulf %0, %54 : vector<8x128xf32>
    %c4_15 = arith.constant 4 : index
    %56 = memref.load %arg2[%c4_15] : memref<20xf32, #tpu.memory_space<smem>>
    %57 = vector.broadcast %56 : f32 to vector<8x128xf32>
    %58 = arith.addf %55, %57 : vector<8x128xf32>
    %cst_16 = arith.constant 0.000000e+00 : f32
    %59 = vector.broadcast %cst_16 : f32 to vector<8x128xf32>
    %60 = arith.maximumf %58, %59 : vector<8x128xf32>
    %c4_17 = arith.constant 4 : index
    %61 = memref.load %arg3[%c4_17] : memref<20xf32, #tpu.memory_space<smem>>
    %62 = vector.broadcast %61 : f32 to vector<8x128xf32>
    %63 = arith.mulf %60, %62 : vector<8x128xf32>
    %64 = arith.addf %52, %63 : vector<8x128xf32>
    %c5 = arith.constant 5 : index
    %65 = memref.load %arg1[%c5] : memref<20xf32, #tpu.memory_space<smem>>
    %66 = vector.broadcast %65 : f32 to vector<8x128xf32>
    %67 = arith.mulf %0, %66 : vector<8x128xf32>
    %c5_18 = arith.constant 5 : index
    %68 = memref.load %arg2[%c5_18] : memref<20xf32, #tpu.memory_space<smem>>
    %69 = vector.broadcast %68 : f32 to vector<8x128xf32>
    %70 = arith.addf %67, %69 : vector<8x128xf32>
    %cst_19 = arith.constant 0.000000e+00 : f32
    %71 = vector.broadcast %cst_19 : f32 to vector<8x128xf32>
    %72 = arith.maximumf %70, %71 : vector<8x128xf32>
    %c5_20 = arith.constant 5 : index
    %73 = memref.load %arg3[%c5_20] : memref<20xf32, #tpu.memory_space<smem>>
    %74 = vector.broadcast %73 : f32 to vector<8x128xf32>
    %75 = arith.mulf %72, %74 : vector<8x128xf32>
    %76 = arith.addf %64, %75 : vector<8x128xf32>
    %c6 = arith.constant 6 : index
    %77 = memref.load %arg1[%c6] : memref<20xf32, #tpu.memory_space<smem>>
    %78 = vector.broadcast %77 : f32 to vector<8x128xf32>
    %79 = arith.mulf %0, %78 : vector<8x128xf32>
    %c6_21 = arith.constant 6 : index
    %80 = memref.load %arg2[%c6_21] : memref<20xf32, #tpu.memory_space<smem>>
    %81 = vector.broadcast %80 : f32 to vector<8x128xf32>
    %82 = arith.addf %79, %81 : vector<8x128xf32>
    %cst_22 = arith.constant 0.000000e+00 : f32
    %83 = vector.broadcast %cst_22 : f32 to vector<8x128xf32>
    %84 = arith.maximumf %82, %83 : vector<8x128xf32>
    %c6_23 = arith.constant 6 : index
    %85 = memref.load %arg3[%c6_23] : memref<20xf32, #tpu.memory_space<smem>>
    %86 = vector.broadcast %85 : f32 to vector<8x128xf32>
    %87 = arith.mulf %84, %86 : vector<8x128xf32>
    %88 = arith.addf %76, %87 : vector<8x128xf32>
    %c7 = arith.constant 7 : index
    %89 = memref.load %arg1[%c7] : memref<20xf32, #tpu.memory_space<smem>>
    %90 = vector.broadcast %89 : f32 to vector<8x128xf32>
    %91 = arith.mulf %0, %90 : vector<8x128xf32>
    %c7_24 = arith.constant 7 : index
    %92 = memref.load %arg2[%c7_24] : memref<20xf32, #tpu.memory_space<smem>>
    %93 = vector.broadcast %92 : f32 to vector<8x128xf32>
    %94 = arith.addf %91, %93 : vector<8x128xf32>
    %cst_25 = arith.constant 0.000000e+00 : f32
    %95 = vector.broadcast %cst_25 : f32 to vector<8x128xf32>
    %96 = arith.maximumf %94, %95 : vector<8x128xf32>
    %c7_26 = arith.constant 7 : index
    %97 = memref.load %arg3[%c7_26] : memref<20xf32, #tpu.memory_space<smem>>
    %98 = vector.broadcast %97 : f32 to vector<8x128xf32>
    %99 = arith.mulf %96, %98 : vector<8x128xf32>
    %100 = arith.addf %88, %99 : vector<8x128xf32>
    %c8 = arith.constant 8 : index
    %101 = memref.load %arg1[%c8] : memref<20xf32, #tpu.memory_space<smem>>
    %102 = vector.broadcast %101 : f32 to vector<8x128xf32>
    %103 = arith.mulf %0, %102 : vector<8x128xf32>
    %c8_27 = arith.constant 8 : index
    %104 = memref.load %arg2[%c8_27] : memref<20xf32, #tpu.memory_space<smem>>
    %105 = vector.broadcast %104 : f32 to vector<8x128xf32>
    %106 = arith.addf %103, %105 : vector<8x128xf32>
    %cst_28 = arith.constant 0.000000e+00 : f32
    %107 = vector.broadcast %cst_28 : f32 to vector<8x128xf32>
    %108 = arith.maximumf %106, %107 : vector<8x128xf32>
    %c8_29 = arith.constant 8 : index
    %109 = memref.load %arg3[%c8_29] : memref<20xf32, #tpu.memory_space<smem>>
    %110 = vector.broadcast %109 : f32 to vector<8x128xf32>
    %111 = arith.mulf %108, %110 : vector<8x128xf32>
    %112 = arith.addf %100, %111 : vector<8x128xf32>
    %c9 = arith.constant 9 : index
    %113 = memref.load %arg1[%c9] : memref<20xf32, #tpu.memory_space<smem>>
    %114 = vector.broadcast %113 : f32 to vector<8x128xf32>
    %115 = arith.mulf %0, %114 : vector<8x128xf32>
    %c9_30 = arith.constant 9 : index
    %116 = memref.load %arg2[%c9_30] : memref<20xf32, #tpu.memory_space<smem>>
    %117 = vector.broadcast %116 : f32 to vector<8x128xf32>
    %118 = arith.addf %115, %117 : vector<8x128xf32>
    %cst_31 = arith.constant 0.000000e+00 : f32
    %119 = vector.broadcast %cst_31 : f32 to vector<8x128xf32>
    %120 = arith.maximumf %118, %119 : vector<8x128xf32>
    %c9_32 = arith.constant 9 : index
    %121 = memref.load %arg3[%c9_32] : memref<20xf32, #tpu.memory_space<smem>>
    %122 = vector.broadcast %121 : f32 to vector<8x128xf32>
    %123 = arith.mulf %120, %122 : vector<8x128xf32>
    %124 = arith.addf %112, %123 : vector<8x128xf32>
    %c10 = arith.constant 10 : index
    %125 = memref.load %arg1[%c10] : memref<20xf32, #tpu.memory_space<smem>>
    %126 = vector.broadcast %125 : f32 to vector<8x128xf32>
    %127 = arith.mulf %0, %126 : vector<8x128xf32>
    %c10_33 = arith.constant 10 : index
    %128 = memref.load %arg2[%c10_33] : memref<20xf32, #tpu.memory_space<smem>>
    %129 = vector.broadcast %128 : f32 to vector<8x128xf32>
    %130 = arith.addf %127, %129 : vector<8x128xf32>
    %cst_34 = arith.constant 0.000000e+00 : f32
    %131 = vector.broadcast %cst_34 : f32 to vector<8x128xf32>
    %132 = arith.maximumf %130, %131 : vector<8x128xf32>
    %c10_35 = arith.constant 10 : index
    %133 = memref.load %arg3[%c10_35] : memref<20xf32, #tpu.memory_space<smem>>
    %134 = vector.broadcast %133 : f32 to vector<8x128xf32>
    %135 = arith.mulf %132, %134 : vector<8x128xf32>
    %136 = arith.addf %124, %135 : vector<8x128xf32>
    %c11 = arith.constant 11 : index
    %137 = memref.load %arg1[%c11] : memref<20xf32, #tpu.memory_space<smem>>
    %138 = vector.broadcast %137 : f32 to vector<8x128xf32>
    %139 = arith.mulf %0, %138 : vector<8x128xf32>
    %c11_36 = arith.constant 11 : index
    %140 = memref.load %arg2[%c11_36] : memref<20xf32, #tpu.memory_space<smem>>
    %141 = vector.broadcast %140 : f32 to vector<8x128xf32>
    %142 = arith.addf %139, %141 : vector<8x128xf32>
    %cst_37 = arith.constant 0.000000e+00 : f32
    %143 = vector.broadcast %cst_37 : f32 to vector<8x128xf32>
    %144 = arith.maximumf %142, %143 : vector<8x128xf32>
    %c11_38 = arith.constant 11 : index
    %145 = memref.load %arg3[%c11_38] : memref<20xf32, #tpu.memory_space<smem>>
    %146 = vector.broadcast %145 : f32 to vector<8x128xf32>
    %147 = arith.mulf %144, %146 : vector<8x128xf32>
    %148 = arith.addf %136, %147 : vector<8x128xf32>
    %c12 = arith.constant 12 : index
    %149 = memref.load %arg1[%c12] : memref<20xf32, #tpu.memory_space<smem>>
    %150 = vector.broadcast %149 : f32 to vector<8x128xf32>
    %151 = arith.mulf %0, %150 : vector<8x128xf32>
    %c12_39 = arith.constant 12 : index
    %152 = memref.load %arg2[%c12_39] : memref<20xf32, #tpu.memory_space<smem>>
    %153 = vector.broadcast %152 : f32 to vector<8x128xf32>
    %154 = arith.addf %151, %153 : vector<8x128xf32>
    %cst_40 = arith.constant 0.000000e+00 : f32
    %155 = vector.broadcast %cst_40 : f32 to vector<8x128xf32>
    %156 = arith.maximumf %154, %155 : vector<8x128xf32>
    %c12_41 = arith.constant 12 : index
    %157 = memref.load %arg3[%c12_41] : memref<20xf32, #tpu.memory_space<smem>>
    %158 = vector.broadcast %157 : f32 to vector<8x128xf32>
    %159 = arith.mulf %156, %158 : vector<8x128xf32>
    %160 = arith.addf %148, %159 : vector<8x128xf32>
    %c13 = arith.constant 13 : index
    %161 = memref.load %arg1[%c13] : memref<20xf32, #tpu.memory_space<smem>>
    %162 = vector.broadcast %161 : f32 to vector<8x128xf32>
    %163 = arith.mulf %0, %162 : vector<8x128xf32>
    %c13_42 = arith.constant 13 : index
    %164 = memref.load %arg2[%c13_42] : memref<20xf32, #tpu.memory_space<smem>>
    %165 = vector.broadcast %164 : f32 to vector<8x128xf32>
    %166 = arith.addf %163, %165 : vector<8x128xf32>
    %cst_43 = arith.constant 0.000000e+00 : f32
    %167 = vector.broadcast %cst_43 : f32 to vector<8x128xf32>
    %168 = arith.maximumf %166, %167 : vector<8x128xf32>
    %c13_44 = arith.constant 13 : index
    %169 = memref.load %arg3[%c13_44] : memref<20xf32, #tpu.memory_space<smem>>
    %170 = vector.broadcast %169 : f32 to vector<8x128xf32>
    %171 = arith.mulf %168, %170 : vector<8x128xf32>
    %172 = arith.addf %160, %171 : vector<8x128xf32>
    %c14 = arith.constant 14 : index
    %173 = memref.load %arg1[%c14] : memref<20xf32, #tpu.memory_space<smem>>
    %174 = vector.broadcast %173 : f32 to vector<8x128xf32>
    %175 = arith.mulf %0, %174 : vector<8x128xf32>
    %c14_45 = arith.constant 14 : index
    %176 = memref.load %arg2[%c14_45] : memref<20xf32, #tpu.memory_space<smem>>
    %177 = vector.broadcast %176 : f32 to vector<8x128xf32>
    %178 = arith.addf %175, %177 : vector<8x128xf32>
    %cst_46 = arith.constant 0.000000e+00 : f32
    %179 = vector.broadcast %cst_46 : f32 to vector<8x128xf32>
    %180 = arith.maximumf %178, %179 : vector<8x128xf32>
    %c14_47 = arith.constant 14 : index
    %181 = memref.load %arg3[%c14_47] : memref<20xf32, #tpu.memory_space<smem>>
    %182 = vector.broadcast %181 : f32 to vector<8x128xf32>
    %183 = arith.mulf %180, %182 : vector<8x128xf32>
    %184 = arith.addf %172, %183 : vector<8x128xf32>
    %c15 = arith.constant 15 : index
    %185 = memref.load %arg1[%c15] : memref<20xf32, #tpu.memory_space<smem>>
    %186 = vector.broadcast %185 : f32 to vector<8x128xf32>
    %187 = arith.mulf %0, %186 : vector<8x128xf32>
    %c15_48 = arith.constant 15 : index
    %188 = memref.load %arg2[%c15_48] : memref<20xf32, #tpu.memory_space<smem>>
    %189 = vector.broadcast %188 : f32 to vector<8x128xf32>
    %190 = arith.addf %187, %189 : vector<8x128xf32>
    %cst_49 = arith.constant 0.000000e+00 : f32
    %191 = vector.broadcast %cst_49 : f32 to vector<8x128xf32>
    %192 = arith.maximumf %190, %191 : vector<8x128xf32>
    %c15_50 = arith.constant 15 : index
    %193 = memref.load %arg3[%c15_50] : memref<20xf32, #tpu.memory_space<smem>>
    %194 = vector.broadcast %193 : f32 to vector<8x128xf32>
    %195 = arith.mulf %192, %194 : vector<8x128xf32>
    %196 = arith.addf %184, %195 : vector<8x128xf32>
    %c16 = arith.constant 16 : index
    %197 = memref.load %arg1[%c16] : memref<20xf32, #tpu.memory_space<smem>>
    %198 = vector.broadcast %197 : f32 to vector<8x128xf32>
    %199 = arith.mulf %0, %198 : vector<8x128xf32>
    %c16_51 = arith.constant 16 : index
    %200 = memref.load %arg2[%c16_51] : memref<20xf32, #tpu.memory_space<smem>>
    %201 = vector.broadcast %200 : f32 to vector<8x128xf32>
    %202 = arith.addf %199, %201 : vector<8x128xf32>
    %cst_52 = arith.constant 0.000000e+00 : f32
    %203 = vector.broadcast %cst_52 : f32 to vector<8x128xf32>
    %204 = arith.maximumf %202, %203 : vector<8x128xf32>
    %c16_53 = arith.constant 16 : index
    %205 = memref.load %arg3[%c16_53] : memref<20xf32, #tpu.memory_space<smem>>
    %206 = vector.broadcast %205 : f32 to vector<8x128xf32>
    %207 = arith.mulf %204, %206 : vector<8x128xf32>
    %208 = arith.addf %196, %207 : vector<8x128xf32>
    %c17 = arith.constant 17 : index
    %209 = memref.load %arg1[%c17] : memref<20xf32, #tpu.memory_space<smem>>
    %210 = vector.broadcast %209 : f32 to vector<8x128xf32>
    %211 = arith.mulf %0, %210 : vector<8x128xf32>
    %c17_54 = arith.constant 17 : index
    %212 = memref.load %arg2[%c17_54] : memref<20xf32, #tpu.memory_space<smem>>
    %213 = vector.broadcast %212 : f32 to vector<8x128xf32>
    %214 = arith.addf %211, %213 : vector<8x128xf32>
    %cst_55 = arith.constant 0.000000e+00 : f32
    %215 = vector.broadcast %cst_55 : f32 to vector<8x128xf32>
    %216 = arith.maximumf %214, %215 : vector<8x128xf32>
    %c17_56 = arith.constant 17 : index
    %217 = memref.load %arg3[%c17_56] : memref<20xf32, #tpu.memory_space<smem>>
    %218 = vector.broadcast %217 : f32 to vector<8x128xf32>
    %219 = arith.mulf %216, %218 : vector<8x128xf32>
    %220 = arith.addf %208, %219 : vector<8x128xf32>
    %c18 = arith.constant 18 : index
    %221 = memref.load %arg1[%c18] : memref<20xf32, #tpu.memory_space<smem>>
    %222 = vector.broadcast %221 : f32 to vector<8x128xf32>
    %223 = arith.mulf %0, %222 : vector<8x128xf32>
    %c18_57 = arith.constant 18 : index
    %224 = memref.load %arg2[%c18_57] : memref<20xf32, #tpu.memory_space<smem>>
    %225 = vector.broadcast %224 : f32 to vector<8x128xf32>
    %226 = arith.addf %223, %225 : vector<8x128xf32>
    %cst_58 = arith.constant 0.000000e+00 : f32
    %227 = vector.broadcast %cst_58 : f32 to vector<8x128xf32>
    %228 = arith.maximumf %226, %227 : vector<8x128xf32>
    %c18_59 = arith.constant 18 : index
    %229 = memref.load %arg3[%c18_59] : memref<20xf32, #tpu.memory_space<smem>>
    %230 = vector.broadcast %229 : f32 to vector<8x128xf32>
    %231 = arith.mulf %228, %230 : vector<8x128xf32>
    %232 = arith.addf %220, %231 : vector<8x128xf32>
    %c19 = arith.constant 19 : index
    %233 = memref.load %arg1[%c19] : memref<20xf32, #tpu.memory_space<smem>>
    %234 = vector.broadcast %233 : f32 to vector<8x128xf32>
    %235 = arith.mulf %0, %234 : vector<8x128xf32>
    %c19_60 = arith.constant 19 : index
    %236 = memref.load %arg2[%c19_60] : memref<20xf32, #tpu.memory_space<smem>>
    %237 = vector.broadcast %236 : f32 to vector<8x128xf32>
    %238 = arith.addf %235, %237 : vector<8x128xf32>
    %cst_61 = arith.constant 0.000000e+00 : f32
    %239 = vector.broadcast %cst_61 : f32 to vector<8x128xf32>
    %240 = arith.maximumf %238, %239 : vector<8x128xf32>
    %c19_62 = arith.constant 19 : index
    %241 = memref.load %arg3[%c19_62] : memref<20xf32, #tpu.memory_space<smem>>
    %242 = vector.broadcast %241 : f32 to vector<8x128xf32>
    %243 = arith.mulf %240, %242 : vector<8x128xf32>
    %244 = arith.addf %232, %243 : vector<8x128xf32>
    %c0_63 = arith.constant 0 : index
    %c0_64 = arith.constant 0 : index
    %245 = vector.load %arg6[%c0_63, %c0_64] : memref<8x128xf32, #tpu.memory_space<vmem>>, vector<8x128xf32>
    tpu.vector_store %arg6[%c0_63, %c0_64], %244 {strides = array<i32>} : memref<8x128xf32, #tpu.memory_space<vmem>>, vector<8x128xf32>,
    return
  }
  func.func @transform_0(%arg0: i32) -> i32 {
    %c0_i32 = arith.constant 0 : i32
    %c0_i32_0 = arith.constant 0 : i32
    return %c0_i32 : i32
  }
  func.func @transform_1(%arg0: i32) -> i32 {
    %c0_i32 = arith.constant 0 : i32
    %c0_i32_0 = arith.constant 0 : i32
    return %c0_i32 : i32
  }
  func.func @transform_2(%arg0: i32) -> i32 {
    %c0_i32 = arith.constant 0 : i32
    %c0_i32_0 = arith.constant 0 : i32
    return %c0_i32 : i32
  }
  func.func @transform_3(%arg0: i32) -> i32 {
    %c0_i32 = arith.constant 0 : i32
    %c0_i32_0 = arith.constant 0 : i32
    return %c0_i32 : i32
  }
  func.func @transform_4(%arg0: i32) -> (i32, i32) {
    %c0_i32 = arith.constant 0 : i32
    %c0_i32_0 = arith.constant 0 : i32
    return %arg0, %c0_i32 : i32, i32
  }
  func.func @transform_5(%arg0: i32) -> (i32, i32) {
    %c0_i32 = arith.constant 0 : i32
    %c0_i32_0 = arith.constant 0 : i32
    return %arg0, %c0_i32 : i32, i32
  }
}

</mosaic_0001>

<llo_original>
// kernel: tpu_custom_call.1
$region0: #{tpu_custom_call.1}
  #allocation0 [shape = 'u32[]', space=smem, size = 0x4, offset = 0x4, fixed_abs, tag = 'smem constant byte address 0x4 - core index']
  #allocation1 [shape = 'u32[144,128]{1,0:T(1,128)}', space=vmem, size = 0x12000, scoped, tag = 'internal scratch']
  #allocation2 [shape = 'f32[1]{0:T(128)S(6)}', space=smem, size = 0x200, scoped, tag = 'scoped memory for tpu_custom_call.1']
  %s0 = inlined_call_operand.vmem [shape: f32[20], index: 0, kind: input, shape index: {}]
  %s1 = inlined_call_operand.vmem [shape: f32[20], index: 1, kind: input, shape index: {}]
  %s2 = inlined_call_operand.vmem [shape: f32[20], index: 2, kind: input, shape index: {}]
  %s3 = inlined_call_operand.<no memory space> [shape: f32[1], index: 3, kind: input, shape index: {}]
  %s4 = inlined_call_operand.vmem [shape: f32[8,128], index: 4, kind: input, shape index: {}]
  %s5 = inlined_call_operand.hbm [shape: f32[8,128], index: 5, kind: output, shape index: {}]
  %s6 = sld [smem:[#allocation0]]
  $region42: #{tpu_custom_call.1} parent=0
    _
  %s8 = ssub.s32 1, %s6
  %s9 = scalar_select 0, %s8, %s6
  %10 = sst [smem:[#allocation2]] %s3
  $region1: #{tpu_custom_call.1} parent=0
    #allocation3 [shape = 'u8[512]{0}', space=smem, size = 0x200, scoped, tag = 'input window, operand 0, single buffered']
    #allocation4 [shape = 's32[1]{0}', space=sflag, size = 0x4, scoped, tag = 'scoped memory for tpu_custom_call.1']
    #allocation5 [shape = 's32[1]{0}', space=sflag, size = 0x4, scoped, tag = 'scoped memory for tpu_custom_call.1']
    #allocation6 [shape = 'u8[512]{0}', space=smem, size = 0x200, scoped, tag = 'input window, operand 1, single buffered']
    #allocation7 [shape = 's32[1]{0}', space=sflag, size = 0x4, scoped, tag = 'scoped memory for tpu_custom_call.1']
    #allocation8 [shape = 'u8[512]{0}', space=smem, size = 0x200, scoped, tag = 'input window, operand 2, single buffered']
    #allocation9 [shape = 'u8[4096]{0}', space=vmem, size = 0x1000, scoped, tag = 'output window, operand 0, single buffered']
    %11 = vsyncpa [#allocation5], 0
    %12 = vsyncpa [#allocation7], 0
    %13 = vsyncpa [#allocation4], 0
    // Predicated region
    $region2: #{tpu_custom_call.1} parent=1 // pred_check
      _
    $region3: #{tpu_custom_call.1} parent=1 // pred_check_branch
      %15 = sbr.rel (0) target = $region5
    $region4: #{tpu_custom_call.1} parent=1 // pred_region
      %s17 = ssub.s32 16, 16
      %18 = vsyncadd [#allocation5], %s17
      %s20 = sshll.u32 %s0, 4
      %s21 = int_to_ptr.vmem [resolvable:$true] %s20
      %23 = dma.vmem_to_smem %s21, 16, [#allocation3], [#allocation5]
    $region5: #{tpu_custom_call.1} parent=1 // pred_fallthru
      _
    // Predicated region
    $region6: #{tpu_custom_call.1} parent=1 // pred_check
      _
    $region7: #{tpu_custom_call.1} parent=1 // pred_check_branch
      %25 = sbr.rel (0) target = $region9
    $region8: #{tpu_custom_call.1} parent=1 // pred_region
      %s27 = ssub.s32 16, 16
      %28 = vsyncadd [#allocation7], %s27
      %s30 = sshll.u32 %s1, 4
      %s31 = int_to_ptr.vmem [resolvable:$true] %s30
      %33 = dma.vmem_to_smem %s31, 16, [#allocation6], [#allocation7]
    $region9: #{tpu_custom_call.1} parent=1 // pred_fallthru
      _
    // Predicated region
    $region10: #{tpu_custom_call.1} parent=1 // pred_check
      _
    $region11: #{tpu_custom_call.1} parent=1 // pred_check_branch
      %35 = sbr.rel (0) target = $region13
    $region12: #{tpu_custom_call.1} parent=1 // pred_region
      %s37 = ssub.s32 16, 16
      %38 = vsyncadd [#allocation7], %s37
      %s40 = sshll.u32 %s2, 4
      %s41 = int_to_ptr.vmem [resolvable:$true] %s40
      %43 = dma.vmem_to_smem %s41, 16, [#allocation8], [#allocation7]
    $region13: #{tpu_custom_call.1} parent=1 // pred_fallthru
      _
    // Predicated region
    $region14: #{tpu_custom_call.1} parent=1 // pred_check
      _
    $region15: #{tpu_custom_call.1} parent=1 // pred_check_branch
      %45 = sbr.rel (0) target = $region17
    $region16: #{tpu_custom_call.1} parent=1 // pred_region
      _
    $region17: #{tpu_custom_call.1} parent=1 // pred_fallthru
      _
    // Predicated region
    $region18: #{tpu_custom_call.1} parent=1 // pred_check
      _
    $region19: #{tpu_custom_call.1} parent=1 // pred_check_branch
      %47 = sbr.rel (0) target = $region21
    $region20: #{tpu_custom_call.1} parent=1 // pred_region
      _
    $region21: #{tpu_custom_call.1} parent=1 // pred_fallthru
      _
    // Predicated region
    $region22: #{tpu_custom_call.1} parent=1 // pred_check
      _
    $region23: #{tpu_custom_call.1} parent=1 // pred_check_branch
      %49 = sbr.rel (0) target = $region25
    $region24: #{tpu_custom_call.1} parent=1 // pred_region
      %50 = dma.done [#allocation5], 16
    $region25: #{tpu_custom_call.1} parent=1 // pred_fallthru
      _
    // Predicated region
    $region26: #{tpu_custom_call.1} parent=1 // pred_check
      _
    $region27: #{tpu_custom_call.1} parent=1 // pred_check_branch
      %52 = sbr.rel (0) target = $region29
    $region28: #{tpu_custom_call.1} parent=1 // pred_region
      %53 = dma.done [#allocation7], 16
    $region29: #{tpu_custom_call.1} parent=1 // pred_fallthru
      _
    // Predicated region
    $region30: #{tpu_custom_call.1} parent=1 // pred_check
      _
    $region31: #{tpu_custom_call.1} parent=1 // pred_check_branch
      %55 = sbr.rel (0) target = $region33
    $region32: #{tpu_custom_call.1} parent=1 // pred_region
      %56 = dma.done [#allocation7], 16
    $region33: #{tpu_custom_call.1} parent=1 // pred_fallthru
      _
    %57 = sfence
    %v58 = vld [vmem:[%s4] sm:$0xff]
    %s59 = sld [smem:[#allocation2]]
    %v60 = vstv %s59
    %v61 = vadd.f32 %v60, 0.0
    %s62 = sld [smem:[#allocation3]]
    %v63 = vstv %s62
    %v64 = vmul.f32 %v58, %v63
    %s65 = sld [smem:[#allocation6]]
    %v66 = vstv %s65
    %v67 = vadd.f32 %v64, %v66
    %v68 = vmax.f32 %v67, 0.0
    %s69 = sld [smem:[#allocation8]]
    %v70 = vstv %s69
    %v71 = vmul.f32 %v68, %v70
    %v72 = vadd.f32 %v61, %v71
    %s73 = sld [smem:[#allocation3 + $0x1]]
    %v74 = vstv %s73
    %v75 = vmul.f32 %v58, %v74
    %s76 = sld [smem:[#allocation6 + $0x1]]
    %v77 = vstv %s76
    %v78 = vadd.f32 %v75, %v77
    %v79 = vmax.f32 %v78, 0.0
    %s80 = sld [smem:[#allocation8 + $0x1]]
    %v81 = vstv %s80
    %v82 = vmul.f32 %v79, %v81
    %v83 = vadd.f32 %v72, %v82
    %s84 = sld [smem:[#allocation3 + $0x2]]
    %v85 = vstv %s84
    %v86 = vmul.f32 %v58, %v85
    %s87 = sld [smem:[#allocation6 + $0x2]]
    %v88 = vstv %s87
    %v89 = vadd.f32 %v86, %v88
    %v90 = vmax.f32 %v89, 0.0
    %s91 = sld [smem:[#allocation8 + $0x2]]
    %v92 = vstv %s91
    %v93 = vmul.f32 %v90, %v92
    %v94 = vadd.f32 %v83, %v93
    %s95 = sld [smem:[#allocation3 + $0x3]]
    %v96 = vstv %s95
    %v97 = vmul.f32 %v58, %v96
    %s98 = sld [smem:[#allocation6 + $0x3]]
    %v99 = vstv %s98
    %v100 = vadd.f32 %v97, %v99
    %v101 = vmax.f32 %v100, 0.0
    %s102 = sld [smem:[#allocation8 + $0x3]]
    %v103 = vstv %s102
    %v104 = vmul.f32 %v101, %v103
    %v105 = vadd.f32 %v94, %v104
    %s106 = sld [smem:[#allocation3 + $0x4]]
    %v107 = vstv %s106
    %v108 = vmul.f32 %v58, %v107
    %s109 = sld [smem:[#allocation6 + $0x4]]
    %v110 = vstv %s109
    %v111 = vadd.f32 %v108, %v110
    %v112 = vmax.f32 %v111, 0.0
    %s113 = sld [smem:[#allocation8 + $0x4]]
    %v114 = vstv %s113
    %v115 = vmul.f32 %v112, %v114
    %v116 = vadd.f32 %v105, %v115
    %s117 = sld [smem:[#allocation3 + $0x5]]
    %v118 = vstv %s117
    %v119 = vmul.f32 %v58, %v118
    %s120 = sld [smem:[#allocation6 + $0x5]]
    %v121 = vstv %s120
    %v122 = vadd.f32 %v119, %v121
    %v123 = vmax.f32 %v122, 0.0
    %s124 = sld [smem:[#allocation8 + $0x5]]
    %v125 = vstv %s124
    %v126 = vmul.f32 %v123, %v125
    %v127 = vadd.f32 %v116, %v126
    %s128 = sld [smem:[#allocation3 + $0x6]]
    %v129 = vstv %s128
    %v130 = vmul.f32 %v58, %v129
    %s131 = sld [smem:[#allocation6 + $0x6]]
    %v132 = vstv %s131
    %v133 = vadd.f32 %v130, %v132
    %v134 = vmax.f32 %v133, 0.0
    %s135 = sld [smem:[#allocation8 + $0x6]]
    %v136 = vstv %s135
    %v137 = vmul.f32 %v134, %v136
    %v138 = vadd.f32 %v127, %v137
    %s139 = sld [smem:[#allocation3 + $0x7]]
    %v140 = vstv %s139
    %v141 = vmul.f32 %v58, %v140
    %s142 = sld [smem:[#allocation6 + $0x7]]
    %v143 = vstv %s142
    %v144 = vadd.f32 %v141, %v143
    %v145 = vmax.f32 %v144, 0.0
    %s146 = sld [smem:[#allocation8 + $0x7]]
    %v147 = vstv %s146
    %v148 = vmul.f32 %v145, %v147
    %v149 = vadd.f32 %v138, %v148
    %s150 = sld [smem:[#allocation3 + $0x8]]
    %v151 = vstv %s150
    %v152 = vmul.f32 %v58, %v151
    %s153 = sld [smem:[#allocation6 + $0x8]]
    %v154 = vstv %s153
    %v155 = vadd.f32 %v152, %v154
    %v156 = vmax.f32 %v155, 0.0
    %s157 = sld [smem:[#allocation8 + $0x8]]
    %v158 = vstv %s157
    %v159 = vmul.f32 %v156, %v158
    %v160 = vadd.f32 %v149, %v159
    %s161 = sld [smem:[#allocation3 + $0x9]]
    %v162 = vstv %s161
    %v163 = vmul.f32 %v58, %v162
    %s164 = sld [smem:[#allocation6 + $0x9]]
    %v165 = vstv %s164
    %v166 = vadd.f32 %v163, %v165
    %v167 = vmax.f32 %v166, 0.0
    %s168 = sld [smem:[#allocation8 + $0x9]]
    %v169 = vstv %s168
    %v170 = vmul.f32 %v167, %v169
    %v171 = vadd.f32 %v160, %v170
    %s172 = sld [smem:[#allocation3 + $0xa]]
    %v173 = vstv %s172
    %v174 = vmul.f32 %v58, %v173
    %s175 = sld [smem:[#allocation6 + $0xa]]
    %v176 = vstv %s175
    %v177 = vadd.f32 %v174, %v176
    %v178 = vmax.f32 %v177, 0.0
    %s179 = sld [smem:[#allocation8 + $0xa]]
    %v180 = vstv %s179
    %v181 = vmul.f32 %v178, %v180
    %v182 = vadd.f32 %v171, %v181
    %s183 = sld [smem:[#allocation3 + $0xb]]
    %v184 = vstv %s183
    %v185 = vmul.f32 %v58, %v184
    %s186 = sld [smem:[#allocation6 + $0xb]]
    %v187 = vstv %s186
    %v188 = vadd.f32 %v185, %v187
    %v189 = vmax.f32 %v188, 0.0
    %s190 = sld [smem:[#allocation8 + $0xb]]
    %v191 = vstv %s190
    %v192 = vmul.f32 %v189, %v191
    %v193 = vadd.f32 %v182, %v192
    %s194 = sld [smem:[#allocation3 + $0xc]]
    %v195 = vstv %s194
    %v196 = vmul.f32 %v58, %v195
    %s197 = sld [smem:[#allocation6 + $0xc]]
    %v198 = vstv %s197
    %v199 = vadd.f32 %v196, %v198
    %v200 = vmax.f32 %v199, 0.0
    %s201 = sld [smem:[#allocation8 + $0xc]]
    %v202 = vstv %s201
    %v203 = vmul.f32 %v200, %v202
    %v204 = vadd.f32 %v193, %v203
    %s205 = sld [smem:[#allocation3 + $0xd]]
    %v206 = vstv %s205
    %v207 = vmul.f32 %v58, %v206
    %s208 = sld [smem:[#allocation6 + $0xd]]
    %v209 = vstv %s208
    %v210 = vadd.f32 %v207, %v209
    %v211 = vmax.f32 %v210, 0.0
    %s212 = sld [smem:[#allocation8 + $0xd]]
    %v213 = vstv %s212
    %v214 = vmul.f32 %v211, %v213
    %v215 = vadd.f32 %v204, %v214
    %s216 = sld [smem:[#allocation3 + $0xe]]
    %v217 = vstv %s216
    %v218 = vmul.f32 %v58, %v217
    %s219 = sld [smem:[#allocation6 + $0xe]]
    %v220 = vstv %s219
    %v221 = vadd.f32 %v218, %v220
    %v222 = vmax.f32 %v221, 0.0
    %s223 = sld [smem:[#allocation8 + $0xe]]
    %v224 = vstv %s223
    %v225 = vmul.f32 %v222, %v224
    %v226 = vadd.f32 %v215, %v225
    %s227 = sld [smem:[#allocation3 + $0xf]]
    %v228 = vstv %s227
    %v229 = vmul.f32 %v58, %v228
    %s230 = sld [smem:[#allocation6 + $0xf]]
    %v231 = vstv %s230
    %v232 = vadd.f32 %v229, %v231
    %v233 = vmax.f32 %v232, 0.0
    %s234 = sld [smem:[#allocation8 + $0xf]]
    %v235 = vstv %s234
    %v236 = vmul.f32 %v233, %v235
    %v237 = vadd.f32 %v226, %v236
    %s238 = sld [smem:[#allocation3 + $0x10]]
    %v239 = vstv %s238
    %v240 = vmul.f32 %v58, %v239
    %s241 = sld [smem:[#allocation6 + $0x10]]
    %v242 = vstv %s241
    %v243 = vadd.f32 %v240, %v242
    %v244 = vmax.f32 %v243, 0.0
    %s245 = sld [smem:[#allocation8 + $0x10]]
    %v246 = vstv %s245
    %v247 = vmul.f32 %v244, %v246
    %v248 = vadd.f32 %v237, %v247
    %s249 = sld [smem:[#allocation3 + $0x11]]
    %v250 = vstv %s249
    %v251 = vmul.f32 %v58, %v250
    %s252 = sld [smem:[#allocation6 + $0x11]]
    %v253 = vstv %s252
    %v254 = vadd.f32 %v251, %v253
    %v255 = vmax.f32 %v254, 0.0
    %s256 = sld [smem:[#allocation8 + $0x11]]
    %v257 = vstv %s256
    %v258 = vmul.f32 %v255, %v257
    %v259 = vadd.f32 %v248, %v258
    %s260 = sld [smem:[#allocation3 + $0x12]]
    %v261 = vstv %s260
    %v262 = vmul.f32 %v58, %v261
    %s263 = sld [smem:[#allocation6 + $0x12]]
    %v264 = vstv %s263
    %v265 = vadd.f32 %v262, %v264
    %v266 = vmax.f32 %v265, 0.0
    %s267 = sld [smem:[#allocation8 + $0x12]]
    %v268 = vstv %s267
    %v269 = vmul.f32 %v266, %v268
    %v270 = vadd.f32 %v259, %v269
    %s271 = sld [smem:[#allocation3 + $0x13]]
    %v272 = vstv %s271
    %v273 = vmul.f32 %v58, %v272
    %s274 = sld [smem:[#allocation6 + $0x13]]
    %v275 = vstv %s274
    %v276 = vadd.f32 %v273, %v275
    %v277 = vmax.f32 %v276, 0.0
    %s278 = sld [smem:[#allocation8 + $0x13]]
    %v279 = vstv %s278
    %v280 = vmul.f32 %v277, %v279
    %v281 = vadd.f32 %v270, %v280
    %282 = vst [vmem:[#allocation9] sm:$0xff] %v281
    // Predicated region
    $region34: #{tpu_custom_call.1} parent=1 // pred_check
      _
    $region35: #{tpu_custom_call.1} parent=1 // pred_check_branch
      %284 = sbr.rel (0) target = $region37
    $region36: #{tpu_custom_call.1} parent=1 // pred_region
      %s286 = ssub.s32 128, 128
      %287 = vsyncadd [#allocation4], %s286
      %s289 = sshll.u32 [#allocation9], 4
      %s290 = int_to_ptr.vmem [resolvable:$true] %s289
      %292 = dma.vmem_to_hbm [thread:$0]  %s290, 128, %s5, [#allocation4]
    $region37: #{tpu_custom_call.1} parent=1 // pred_fallthru
      _
    // Predicated region
    $region38: #{tpu_custom_call.1} parent=1 // pred_check
      _
    $region39: #{tpu_custom_call.1} parent=1 // pred_check_branch
      %294 = sbr.rel (0) target = $region41
    $region40: #{tpu_custom_call.1} parent=1 // pred_region
      %295 = dma.done [#allocation4], 128
    $region41: #{tpu_custom_call.1} parent=1 // pred_fallthru
      _
    %296 = vsyncpa [#allocation4], 1
    %297 = vsyncpa [#allocation5], 1
    %298 = vsyncpa [#allocation7], 1

</llo_original>
